<compile_context>
chip_gen: v7x
topology: tpu7x:2x2x1
jax: 0.10.0
libtpu: 0.0.40
codegen_flags: <defaults>
</compile_context>

<pallas_src>
import functools

import jax
import jax.numpy as jnp
from jax.experimental import pallas as pl
from jax.experimental.pallas import tpu as pltpu

_LANES = 512              # lane-dense last dim (multiple of 128 AND of 4)
_MAX_BLOCK_ROWS = 1024    # 1024 x 512 f32 = 2 MiB per tile buffer
_MIN_PALLAS_ELEMS = 4096  # below this, an XLA-fused clamp beats a kernel launch

# The (lane % 4) coordinate-mapping trick requires both of these.
assert _LANES % 128 == 0 and _LANES % 4 == 0


def _cdiv(a, b):
    return -(-a // b)


def _round_up(a, m):
    return _cdiv(a, m) * m


def _clip_boxes_kernel(boxes_ref, out_ref, *, w_minus_1, h_minus_1):
    dtype = boxes_ref.dtype
    # Tile is (block_rows, _LANES); because the flatten is row-major
    # contiguous and _LANES % 4 == 0, the coordinate index of every element
    # is simply (lane % 4). Bounds are built ONCE per tile at (1, _LANES)
    # and broadcast over sublanes by the min/max below, so per-element work
    # is just 1 max + 1 min on the VPU.
    col = jax.lax.broadcasted_iota(jnp.int32, (1, _LANES), dimension=1) % 4
    lower = jnp.where(col < 2, jnp.array(0.0, dtype), jnp.array(-jnp.inf, dtype))
    upper = jnp.where(
        col == 2,
        jnp.array(w_minus_1, dtype),
        jnp.where(col == 3, jnp.array(h_minus_1, dtype), jnp.array(jnp.inf, dtype)),
    )
    # Clamp natively in the input dtype (no f32 round-trip).
    out_ref[...] = jnp.minimum(jnp.maximum(boxes_ref[...], lower), upper)


def _clip_boxes_jnp(boxes, height, width):
    """Fused-XLA fallback for ragged / tiny / integer-dtype inputs."""
    x1 = jnp.maximum(boxes[..., 0], 0)
    y1 = jnp.maximum(boxes[..., 1], 0)
    x2 = jnp.minimum(boxes[..., 2], width - 1)
    y2 = jnp.minimum(boxes[..., 3], height - 1)
    return jnp.stack([x1, y1, x2, y2], axis=-1).astype(boxes.dtype)


def clip_boxes(boxes, img):
    """Functional equivalent of ClipBoxes.forward (returns clipped boxes)."""
    _batch, _chan, height, width = img.shape
    B, N, C = boxes.shape
    assert C == 4, "boxes must have 4 coordinates per box"

    total = B * N * 4

    # Fallback: ragged lane count would need pad+slice (full extra HBM
    # passes), tiny inputs don't amortize a launch, and integer dtypes have
    # no inf sentinel -- let XLA fuse the clamp instead.
    if (not jnp.issubdtype(boxes.dtype, jnp.floating)
            or total % _LANES != 0
            or total < _MIN_PALLAS_ELEMS):
        return _clip_boxes_jnp(boxes, height, width)

    rows = total // _LANES  # exact -> the reshape below is a zero-copy bitcast
    if rows <= 8:
        block_rows = rows   # single block equal to full array dims
    else:
        # >= 2 grid steps so v7x's two TensorCores both stream (harmless on
        # 1-TC chips); cap at 2 MiB tiles so double-buffered in+out (~8 MiB)
        # fits v5e's 16 MiB scoped-VMEM default. Pallas handles a partial
        # trailing block (elementwise op, so dropped OOB writes are fine).
        block_rows = min(_MAX_BLOCK_ROWS, _round_up(_cdiv(rows, 2), 8))
    num_blocks = _cdiv(rows, block_rows)

    flat2d = boxes.reshape(rows, _LANES)  # lane-dense view; no pad, no copy

    kernel = functools.partial(
        _clip_boxes_kernel,
        w_minus_1=float(width - 1),
        h_minus_1=float(height - 1),
    )

    out2d = pl.pallas_call(
        kernel,
        out_shape=jax.ShapeDtypeStruct((rows, _LANES), boxes.dtype),
        grid_spec=pltpu.PrefetchScalarGridSpec(
            num_scalar_prefetch=0,
            grid=(num_blocks,),
            in_specs=[pl.BlockSpec((block_rows, _LANES), lambda i: (i, 0))],
            out_specs=pl.BlockSpec((block_rows, _LANES), lambda i: (i, 0)),
        ),
        compiler_params=pltpu.CompilerParams(
            dimension_semantics=("parallel",),
        ),
    )(flat2d)

    return out2d.reshape(B, N, 4)


def _reference(boxes, H, W):
    ref = boxes
    ref = ref.at[:, :, 0].set(jnp.maximum(ref[:, :, 0], 0.0))
    ref = ref.at[:, :, 1].set(jnp.maximum(ref[:, :, 1], 0.0))
    ref = ref.at[:, :, 2].set(jnp.minimum(ref[:, :, 2], W - 1))
    ref = ref.at[:, :, 3].set(jnp.minimum(ref[:, :, 3], H - 1))
    return ref


if __name__ == "__main__":
    key = jax.random.PRNGKey(0)
    k1, k2, k3 = jax.random.split(key, 3)

    # img only matters for its (static) NCHW shape.
    img = jax.random.normal(k1, (2, 4, 16, 16), dtype=jnp.float32)
    H, W = img.shape[2], img.shape[3]

    # Main path: B*N*4 % 512 == 0 -> zero-copy lane-dense Pallas kernel,
    # 2 parallel grid blocks.
    B, N = 2, 4096
    boxes = jax.random.uniform(
        k2, (B, N, 4), dtype=jnp.float32, minval=-10.0, maxval=30.0
    )
    out = jax.block_until_ready(clip_boxes(boxes, img))
    ref = _reference(boxes, H, W)
    assert out.shape == ref.shape and out.dtype == ref.dtype
    assert jnp.allclose(out, ref), "mismatch vs reference (pallas path)"

    # Ragged / tiny fallback path (XLA-fused clamp).
    small = jax.random.uniform(
        k3, (2, 8, 4), dtype=jnp.float32, minval=-10.0, maxval=30.0
    )
    small_out = jax.block_until_ready(clip_boxes(small, img))
    assert jnp.allclose(small_out, _reference(small, H, W)), "mismatch (fallback path)"

    print("KERNEL_OK")
</pallas_src>

<mosaic_0001>
module attributes {stable_mosaic.version = 11 : i64} {
  func.func @_clip_boxes_kernel(%arg0: i32, %arg1: memref<32x512xf32, #tpu.memory_space<vmem>>, %arg2: memref<32x512xf32, #tpu.memory_space<vmem>>) attributes {dimension_semantics = [#tpu.dimension_semantics<parallel>], iteration_bounds = array<i64: 2>, scalar_prefetch = 0 : i64, scratch_operands = 0 : i64, tpu.core_type = #tpu.core_type<tc>, window_params = [{transform_indices = @transform_0, window_bounds = array<i64: 32, 512>}, {transform_indices = @transform_1, window_bounds = array<i64: 32, 512>}]} {
    %0 = tpu.iota {dimensions = array<i32: 1>} : vector<1x512xi32>
    %c4_i32 = arith.constant 4 : i32
    %c0_i32 = arith.constant 0 : i32
    %1 = arith.cmpi eq, %c4_i32, %c0_i32 : i32
    %c1_i32 = arith.constant 1 : i32
    %2 = arith.select %1, %c1_i32, %c4_i32 : i32
    %3 = vector.broadcast %2 : i32 to vector<1x512xi32>
    %4 = arith.remsi %0, %3 : vector<1x512xi32>
    %c0_i32_0 = arith.constant 0 : i32
    %5 = vector.broadcast %c0_i32_0 : i32 to vector<1x512xi32>
    %6 = arith.cmpi ne, %4, %5 : vector<1x512xi32>
    %c0_i32_1 = arith.constant 0 : i32
    %7 = vector.broadcast %c0_i32_1 : i32 to vector<1x512xi32>
    %8 = arith.cmpi slt, %4, %7 : vector<1x512xi32>
    %c0_i32_2 = arith.constant 0 : i32
    %9 = arith.cmpi slt, %2, %c0_i32_2 : i32
    %10 = vector.broadcast %9 : i1 to vector<1x512xi1>
    %11 = vector.broadcast %10 : vector<1x512xi1> to vector<1x512xi1>
    %12 = arith.xori %8, %11 : vector<1x512xi1>
    %13 = arith.andi %12, %6 : vector<1x512xi1>
    %14 = vector.broadcast %2 : i32 to vector<1x512xi32>
    %15 = arith.addi %4, %14 : vector<1x512xi32>
    %16 = arith.select %13, %15, %4 : vector<1x512xi1>, vector<1x512xi32>
    %c2_i32 = arith.constant 2 : i32
    %17 = vector.broadcast %c2_i32 : i32 to vector<1x512xi32>
    %18 = arith.cmpi slt, %16, %17 : vector<1x512xi32>
    %cst = arith.constant 0.000000e+00 : f32
    %cst_3 = arith.constant 0xFF800000 : f32
    %19 = vector.broadcast %cst : f32 to vector<1x512xf32>
    %20 = vector.broadcast %cst_3 : f32 to vector<1x512xf32>
    %21 = arith.select %18, %19, %20 : vector<1x512xi1>, vector<1x512xf32>
    %c2_i32_4 = arith.constant 2 : i32
    %22 = vector.broadcast %c2_i32_4 : i32 to vector<1x512xi32>
    %23 = arith.cmpi eq, %16, %22 : vector<1x512xi32>
    %c3_i32 = arith.constant 3 : i32
    %24 = vector.broadcast %c3_i32 : i32 to vector<1x512xi32>
    %25 = arith.cmpi eq, %16, %24 : vector<1x512xi32>
    %cst_5 = arith.constant 1.500000e+01 : f32
    %cst_6 = arith.constant 0x7F800000 : f32
    %26 = vector.broadcast %cst_5 : f32 to vector<1x512xf32>
    %27 = vector.broadcast %cst_6 : f32 to vector<1x512xf32>
    %28 = arith.select %25, %26, %27 : vector<1x512xi1>, vector<1x512xf32>
    %cst_7 = arith.constant 1.500000e+01 : f32
    %29 = vector.broadcast %cst_7 : f32 to vector<1x512xf32>
    %30 = arith.select %23, %29, %28 : vector<1x512xi1>, vector<1x512xf32>
    %c0 = arith.constant 0 : index
    %c0_8 = arith.constant 0 : index
    %31 = vector.load %arg1[%c0, %c0_8] : memref<32x512xf32, #tpu.memory_space<vmem>>, vector<32x512xf32>
    %32 = vector.broadcast %21 : vector<1x512xf32> to vector<32x512xf32>
    %33 = arith.maximumf %31, %32 : vector<32x512xf32>
    %34 = vector.broadcast %30 : vector<1x512xf32> to vector<32x512xf32>
    %35 = arith.minimumf %33, %34 : vector<32x512xf32>
    %c0_9 = arith.constant 0 : index
    %c0_10 = arith.constant 0 : index
    %36 = vector.load %arg2[%c0_9, %c0_10] : memref<32x512xf32, #tpu.memory_space<vmem>>, vector<32x512xf32>
    tpu.vector_store %arg2[%c0_9, %c0_10], %35 {strides = array<i32>} : memref<32x512xf32, #tpu.memory_space<vmem>>, vector<32x512xf32>,
    return
  }
  func.func @transform_0(%arg0: i32) -> (i32, i32) {
    %c0_i32 = arith.constant 0 : i32
    %c0_i32_0 = arith.constant 0 : i32
    return %arg0, %c0_i32 : i32, i32
  }
  func.func @transform_1(%arg0: i32) -> (i32, i32) {
    %c0_i32 = arith.constant 0 : i32
    %c0_i32_0 = arith.constant 0 : i32
    return %arg0, %c0_i32 : i32, i32
  }
}

</mosaic_0001>

<llo_original>
// kernel: tpu_custom_call.1
$region0: #{tpu_custom_call.1}
  #allocation0 [shape = 'u32[]', space=smem, size = 0x4, offset = 0x4, fixed_abs, tag = 'smem constant byte address 0x4 - core index']
  #allocation1 [shape = 'u32[144,128]{1,0:T(1,128)}', space=vmem, size = 0x12000, scoped, tag = 'internal scratch']
  %s0 = inlined_call_operand.hbm [shape: f32[64,512], index: 0, kind: input, shape index: {}]
  %s1 = inlined_call_operand.hbm [shape: f32[64,512], index: 1, kind: output, shape index: {}]
  %s2 = sld [smem:[#allocation0]]
  $region41: #{tpu_custom_call.1} parent=0
    _
  %s4 = ssub.s32 1, %s2
  %s5 = scalar_select 0, %s4, %s2
  $region1: #{tpu_custom_call.1} parent=0
    #allocation2 [shape = 'u8[131072]{0}', space=vmem, size = 0x20000, scoped, tag = 'input window, operand 0']
    #allocation3 [shape = 's32[2]{0}', space=sflag, size = 0x8, scoped, tag = 'scoped memory for tpu_custom_call.1']
    #allocation4 [shape = 's32[2]{0}', space=sflag, size = 0x8, scoped, tag = 'scoped memory for tpu_custom_call.1']
    #allocation5 [shape = 'u8[131072]{0}', space=vmem, size = 0x20000, scoped, tag = 'output window, operand 0']
    %6 = vsyncpa [#allocation3], 0
    %s7 = scalar_lea.sflag [#allocation3], 1
    %8 = vsyncpa %s7, 0
    %9 = vsyncpa [#allocation4], 0
    %s10 = scalar_lea.sflag [#allocation4], 1
    %11 = vsyncpa %s10, 0
    loop: start=0, step=1, limit=4
    $region2: #{tpu_custom_call.1} parent=1 // loop_pre_header
      _
    $region3: #{tpu_custom_call.1} parent=1 // loop_header
      %s13 = sphi 0, %s17
      %p14 = scmp.ge.s32.totalorder %s13, 4
      %s23 = sphi 0, %s25
      %s26 = sphi 0, %s23
      %s27 = sphi 0, %s26
      %s43 = sphi 0, %s27
      %s49 = sphi 0, %s51
      %s52 = sphi 0, %s49
      %s53 = sphi 0, %s52
      %s69 = sphi 0, %s53
    $region4: #{tpu_custom_call.1} parent=1 // loop_header_branch
      %16 = sbr.rel (%p14) target = $region8
    $region5: #{tpu_custom_call.1} parent=1 // loop_body
      %s18 = ssub.s32 %s13, 1
      %s19 = ssub.s32 %s13, 2
      %s20 = sadd.s32 %s13, 1
      %s21 = ssub.s32 %s13, %s20
      %p22 = scmp.eq.s32.totalorder %s21, 0
      %s24 = sadd.s32 %s23, 1
      %s25 = scalar_select %p22, %s23, %s24
      %p28 = pneg %p22
      %p29 = scmp.eq.s32.totalorder %s13, 1
      %p30 = por %p28, %p29
      %p31 = scmp.ne.s32.totalorder %s23, %s26
      %p32 = scmp.eq.s32.totalorder %s13, 0
      %p33 = por %p31, %p32
      %p34 = scmp.ne.s32.totalorder %s23, %s26
      %p35 = scmp.eq.s32.totalorder %s18, 1
      %p36 = por %p34, %p35
      %p37 = scmp.ne.s32.totalorder %s26, %s27
      %p38 = scmp.eq.s32.totalorder %s18, 0
      %p39 = por %p37, %p38
      %p40 = scmp.ne.s32.totalorder %s26, %s27
      %p41 = scmp.eq.s32.totalorder %s19, 1
      %p42 = por %p40, %p41
      %p44 = scmp.ne.s32.totalorder %s27, %s43
      %p45 = scmp.eq.s32.totalorder %s19, 0
      %p46 = por %p44, %p45
      %s47 = ssub.s32 %s13, %s20
      %p48 = scmp.eq.s32.totalorder %s47, 0
      %s50 = sadd.s32 %s49, 1
      %s51 = scalar_select %p48, %s49, %s50
      %p54 = pneg %p48
      %p55 = scmp.eq.s32.totalorder %s13, 1
      %p56 = por %p54, %p55
      %p57 = scmp.ne.s32.totalorder %s49, %s52
      %p58 = scmp.eq.s32.totalorder %s13, 0
      %p59 = por %p57, %p58
      %p60 = scmp.ne.s32.totalorder %s49, %s52
      %p61 = scmp.eq.s32.totalorder %s18, 1
      %p62 = por %p60, %p61
      %p63 = scmp.ne.s32.totalorder %s52, %s53
      %p64 = scmp.eq.s32.totalorder %s18, 0
      %p65 = por %p63, %p64
      %p66 = scmp.ne.s32.totalorder %s52, %s53
      %p67 = scmp.eq.s32.totalorder %s19, 1
      %p68 = por %p66, %p67
      %p70 = scmp.ne.s32.totalorder %s53, %s69
      %p71 = scmp.eq.s32.totalorder %s19, 0
      %p72 = por %p70, %p71
      %p73 = scmp.le.s32.totalorder 1, %s13
      %p74 = scmp.lt.s32.totalorder %s13, 3
      %p75 = pnand %p73, %p74
      %p76 = pneg %p75
      // Predicated region
      $region9: #{tpu_custom_call.1} parent=5 // pred_check
        _
      $region10: #{tpu_custom_call.1} parent=5 // pred_check_branch
        %78 = sbr.rel (%p75) target = $region12
      $region11: #{tpu_custom_call.1} parent=5 // pred_region
        %s79 = ssub.s32 %s13, 1
      $region12: #{tpu_custom_call.1} parent=5 // pred_fallthru
        _
      %p80 = scmp.lt.s32.totalorder %s13, 2
      // Predicated region
      $region13: #{tpu_custom_call.1} parent=5 // pred_check
        %p81 = pneg %p80
      $region14: #{tpu_custom_call.1} parent=5 // pred_check_branch
        %83 = sbr.rel (%p81) target = $region16
      $region15: #{tpu_custom_call.1} parent=5 // pred_region
        // Predicated region
        $region17: #{tpu_custom_call.1} parent=15 // pred_check
          %p84 = pneg %p33
        $region18: #{tpu_custom_call.1} parent=15 // pred_check_branch
          %86 = sbr.rel (%p84) target = $region20
        $region19: #{tpu_custom_call.1} parent=15 // pred_region
          %s87 = sand.u32 %s23, 1
          %s88 = scalar_lea.sflag [#allocation3], %s87
          %s89 = sand.u32 %s23, 1
          %s90 = smul.addr %s89, 128
          %s91 = scalar_lea.vmem [#allocation2], %s90
          %s92 = smul.u32 4, %s13
          %s94 = ssub.s32 2048, 2048
          %95 = vsyncadd %s88, %s94
          %s96 = smul.addr %s92, 4
          %s97 = smul.addr %s96, 128
          %s98 = scalar_lea.hbm %s0, %s97
          %s99 = sshll.u32 %s91, 4
          %s100 = int_to_ptr.vmem [resolvable:$true] %s99
          %105 = dma.hbm_to_vmem [thread:$0]  %s98, 2048, %s100, %s88, 512, 512, 32
        $region20: #{tpu_custom_call.1} parent=15 // pred_fallthru
          _
      $region16: #{tpu_custom_call.1} parent=5 // pred_fallthru
        _
      %p106 = scmp.le.s32.totalorder 1, %s13
      %p107 = scmp.lt.s32.totalorder %s13, 3
      %p108 = pnand %p106, %p107
      %p109 = pneg %p108
      // Predicated region
      $region21: #{tpu_custom_call.1} parent=5 // pred_check
        _
      $region22: #{tpu_custom_call.1} parent=5 // pred_check_branch
        %111 = sbr.rel (%p108) target = $region24
      $region23: #{tpu_custom_call.1} parent=5 // pred_region
        %s112 = ssub.s32 %s13, 1
        %s113 = sand.u32 %s26, 1
        %s114 = scalar_lea.sflag [#allocation3], %s113
        %s115 = sand.u32 %s26, 1
        %s116 = smul.addr %s115, 128
        %s117 = scalar_lea.vmem [#allocation2], %s116
        // Predicated region
        $region25: #{tpu_custom_call.1} parent=23 // pred_check
          %p118 = pneg %p39
        $region26: #{tpu_custom_call.1} parent=23 // pred_check_branch
          %120 = sbr.rel (%p118) target = $region28
        $region27: #{tpu_custom_call.1} parent=23 // pred_region
          %121 = dma.done %s114, 2048
        $region28: #{tpu_custom_call.1} parent=23 // pred_fallthru
          _
        %s122 = sand.u32 %s26, 1
        %s123 = scalar_lea.sflag [#allocation3], %s122
        %s124 = sand.u32 %s26, 1
        %s125 = smul.addr %s124, 128
        %s126 = scalar_lea.vmem [#allocation2], %s125
        %p127 = pneg %p39
        %p128 = pneg %p36
        %p129 = pneg %p65
        %p130 = pneg %p62
        %s131 = sand.u32 %s52, 1
        %s132 = scalar_lea.sflag [#allocation4], %s131
        %s133 = sand.u32 %s52, 1
        %s134 = smul.addr %s133, 128
        %s135 = scalar_lea.vmem [#allocation5], %s134
        %s136 = smul.u32 4, %s18
        %s137 = smul.u32 4, %s18
        %v138 = vlaneseq
        %v139 = vand.u32 %v138, 127
        %v140 = vadd.s32 %v139, 128
        %v141 = vadd.s32 %v139, 256
        %v142 = vadd.s32 %v139, 384
        %vm143 = vcmp.lt.s32.totalorder %v139, 0
        %v144 = vsub.s32 0, %v139
        %v145 = vsel %vm143, %v144, %v139
        %v146 = vshrl.u32 %v145, 2
        %v147 = vand.u32 %v145, 3
        %v148 = vsub.s32 0, %v147
        %v149 = vsel %vm143, %v148, %v147
        %vm150 = vcmp.lt.s32.totalorder %v140, 0
        %v151 = vsub.s32 0, %v140
        %v152 = vsel %vm150, %v151, %v140
        %v153 = vshrl.u32 %v152, 2
        %v154 = vand.u32 %v152, 3
        %v155 = vsub.s32 0, %v154
        %v156 = vsel %vm150, %v155, %v154
        %vm157 = vcmp.lt.s32.totalorder %v141, 0
        %v158 = vsub.s32 0, %v141
        %v159 = vsel %vm157, %v158, %v141
        %v160 = vshrl.u32 %v159, 2
        %v161 = vand.u32 %v159, 3
        %v162 = vsub.s32 0, %v161
        %v163 = vsel %vm157, %v162, %v161
        %vm164 = vcmp.lt.s32.totalorder %v142, 0
        %v165 = vsub.s32 0, %v142
        %v166 = vsel %vm164, %v165, %v142
        %v167 = vshrl.u32 %v166, 2
        %v168 = vand.u32 %v166, 3
        %v169 = vsub.s32 0, %v168
        %v170 = vsel %vm164, %v169, %v168
        %vm171 = vcmp.ne.s32.totalorder %v149, 0
        %vm172 = vcmp.ne.s32.totalorder %v156, 0
        %vm173 = vcmp.ne.s32.totalorder %v163, 0
        %vm174 = vcmp.ne.s32.totalorder %v170, 0
        %vm175 = vcmp.lt.s32.totalorder %v149, 0
        %vm176 = vcmp.lt.s32.totalorder %v156, 0
        %vm177 = vcmp.lt.s32.totalorder %v163, 0
        %vm178 = vcmp.lt.s32.totalorder %v170, 0
        %vm179 = vmand %vm175, %vm171
        %vm180 = vmand %vm176, %vm172
        %vm181 = vmand %vm177, %vm173
        %vm182 = vmand %vm178, %vm174
        %v183 = vadd.s32 %v149, 4
        %v184 = vadd.s32 %v156, 4
        %v185 = vadd.s32 %v163, 4
        %v186 = vadd.s32 %v170, 4
        %v187 = vsel %vm179, %v183, %v149
        %v188 = vsel %vm180, %v184, %v156
        %v189 = vsel %vm181, %v185, %v163
        %v190 = vsel %vm182, %v186, %v170
        %vm191 = vcmp.lt.s32.totalorder %v187, 2
        %vm192 = vcmp.lt.s32.totalorder %v188, 2
        %vm193 = vcmp.lt.s32.totalorder %v189, 2
        %vm194 = vcmp.lt.s32.totalorder %v190, 2
        %v195 = vsel %vm191, 0.0, -inf
        %v196 = vsel %vm192, 0.0, -inf
        %v197 = vsel %vm193, 0.0, -inf
        %v198 = vsel %vm194, 0.0, -inf
        %vm199 = vcmp.eq.s32.totalorder %v187, 2
        %vm200 = vcmp.eq.s32.totalorder %v188, 2
        %vm201 = vcmp.eq.s32.totalorder %v189, 2
        %vm202 = vcmp.eq.s32.totalorder %v190, 2
        %vm203 = vcmp.eq.s32.totalorder %v187, 3
        %vm204 = vcmp.eq.s32.totalorder %v188, 3
        %vm205 = vcmp.eq.s32.totalorder %v189, 3
        %vm206 = vcmp.eq.s32.totalorder %v190, 3
        %v207 = vsel %vm203, 15.0, inf
        %v208 = vsel %vm204, 15.0, inf
        %v209 = vsel %vm205, 15.0, inf
        %v210 = vsel %vm206, 15.0, inf
        %v211 = vsel %vm199, 15.0, %v207
        %v212 = vsel %vm200, 15.0, %v208
        %v213 = vsel %vm201, 15.0, %v209
        %v214 = vsel %vm202, 15.0, %v210
        %v215 = vld [vmem:[%s117] sm:$0xff]
        %v216 = vld [vmem:[%s117 + $0x8] sm:$0xff]
        %v217 = vld [vmem:[%s117 + $0x10] sm:$0xff]
        %v218 = vld [vmem:[%s117 + $0x18] sm:$0xff]
        %v219 = vld [vmem:[%s117 + $0x20] sm:$0xff]
        %v220 = vld [vmem:[%s117 + $0x28] sm:$0xff]
        %v221 = vld [vmem:[%s117 + $0x30] sm:$0xff]
        %v222 = vld [vmem:[%s117 + $0x38] sm:$0xff]
        %v223 = vld [vmem:[%s117 + $0x40] sm:$0xff]
        %v224 = vld [vmem:[%s117 + $0x48] sm:$0xff]
        %v225 = vld [vmem:[%s117 + $0x50] sm:$0xff]
        %v226 = vld [vmem:[%s117 + $0x58] sm:$0xff]
        %v227 = vld [vmem:[%s117 + $0x60] sm:$0xff]
        %v228 = vld [vmem:[%s117 + $0x68] sm:$0xff]
        %v229 = vld [vmem:[%s117 + $0x70] sm:$0xff]
        %v230 = vld [vmem:[%s117 + $0x78] sm:$0xff]
        %v231 = vmax.f32 %v215, %v195
        %v232 = vmax.f32 %v216, %v196
        %v233 = vmax.f32 %v217, %v197
        %v234 = vmax.f32 %v218, %v198
        %v235 = vmax.f32 %v219, %v195
        %v236 = vmax.f32 %v220, %v196
        %v237 = vmax.f32 %v221, %v197
        %v238 = vmax.f32 %v222, %v198
        %v239 = vmax.f32 %v223, %v195
        %v240 = vmax.f32 %v224, %v196
        %v241 = vmax.f32 %v225, %v197
        %v242 = vmax.f32 %v226, %v198
        %v243 = vmax.f32 %v227, %v195
        %v244 = vmax.f32 %v228, %v196
        %v245 = vmax.f32 %v229, %v197
        %v246 = vmax.f32 %v230, %v198
        %v247 = vmin.f32 %v231, %v211
        %v248 = vmin.f32 %v232, %v212
        %v249 = vmin.f32 %v233, %v213
        %v250 = vmin.f32 %v234, %v214
        %v251 = vmin.f32 %v235, %v211
        %v252 = vmin.f32 %v236, %v212
        %v253 = vmin.f32 %v237, %v213
        %v254 = vmin.f32 %v238, %v214
        %v255 = vmin.f32 %v239, %v211
        %v256 = vmin.f32 %v240, %v212
        %v257 = vmin.f32 %v241, %v213
        %v258 = vmin.f32 %v242, %v214
        %v259 = vmin.f32 %v243, %v211
        %v260 = vmin.f32 %v244, %v212
        %v261 = vmin.f32 %v245, %v213
        %v262 = vmin.f32 %v246, %v214
        %263 = vst [vmem:[%s135] sm:$0xff] %v247
        %264 = vst [vmem:[%s135 + $0x8] sm:$0xff] %v248
        %265 = vst [vmem:[%s135 + $0x10] sm:$0xff] %v249
        %266 = vst [vmem:[%s135 + $0x18] sm:$0xff] %v250
        %267 = vst [vmem:[%s135 + $0x20] sm:$0xff] %v251
        %268 = vst [vmem:[%s135 + $0x28] sm:$0xff] %v252
        %269 = vst [vmem:[%s135 + $0x30] sm:$0xff] %v253
        %270 = vst [vmem:[%s135 + $0x38] sm:$0xff] %v254
        %271 = vst [vmem:[%s135 + $0x40] sm:$0xff] %v255
        %272 = vst [vmem:[%s135 + $0x48] sm:$0xff] %v256
        %273 = vst [vmem:[%s135 + $0x50] sm:$0xff] %v257
        %274 = vst [vmem:[%s135 + $0x58] sm:$0xff] %v258
        %275 = vst [vmem:[%s135 + $0x60] sm:$0xff] %v259
        %276 = vst [vmem:[%s135 + $0x68] sm:$0xff] %v260
        %277 = vst [vmem:[%s135 + $0x70] sm:$0xff] %v261
        %278 = vst [vmem:[%s135 + $0x78] sm:$0xff] %v262
        %s279 = sand.u32 %s52, 1
        %s280 = scalar_lea.sflag [#allocation4], %s279
        %s281 = sand.u32 %s52, 1
        %s282 = smul.addr %s281, 128
        %s283 = scalar_lea.vmem [#allocation5], %s282
        // Predicated region
        $region29: #{tpu_custom_call.1} parent=23 // pred_check
          %p284 = pneg %p62
        $region30: #{tpu_custom_call.1} parent=23 // pred_check_branch
          %286 = sbr.rel (%p284) target = $region32
        $region31: #{tpu_custom_call.1} parent=23 // pred_region
          %s287 = smul.u32 4, %s18
          %s289 = ssub.s32 2048, 2048
          %290 = vsyncadd %s280, %s289
          %s291 = smul.addr %s287, 4
          %s292 = smul.addr %s291, 128
          %s293 = scalar_lea.hbm %s1, %s292
          %s294 = sshll.u32 %s283, 4
          %s295 = int_to_ptr.vmem [resolvable:$true] %s294
          %300 = dma.vmem_to_hbm [thread:$0]  %s295, 2048, %s293, %s280, 512, 512, 32
        $region32: #{tpu_custom_call.1} parent=23 // pred_fallthru
          _
      $region24: #{tpu_custom_call.1} parent=5 // pred_fallthru
        _
      %p301 = scmp.le.s32.totalorder 2, %s13
      // Predicated region
      $region33: #{tpu_custom_call.1} parent=5 // pred_check
        %p302 = pneg %p301
      $region34: #{tpu_custom_call.1} parent=5 // pred_check_branch
        %304 = sbr.rel (%p302) target = $region36
      $region35: #{tpu_custom_call.1} parent=5 // pred_region
        %s305 = ssub.s32 %s13, 2
        // Predicated region
        $region37: #{tpu_custom_call.1} parent=35 // pred_check
          %p306 = pneg %p68
        $region38: #{tpu_custom_call.1} parent=35 // pred_check_branch
          %308 = sbr.rel (%p306) target = $region40
        $region39: #{tpu_custom_call.1} parent=35 // pred_region
          %s309 = sand.u32 %s53, 1
          %s310 = scalar_lea.sflag [#allocation4], %s309
          %s311 = sand.u32 %s53, 1
          %s312 = smul.addr %s311, 128
          %s313 = scalar_lea.vmem [#allocation5], %s312
          %314 = dma.done %s310, 2048
        $region40: #{tpu_custom_call.1} parent=35 // pred_fallthru
          _
      $region36: #{tpu_custom_call.1} parent=5 // pred_fallthru
        _
    $region6: #{tpu_custom_call.1} parent=1 // loop_footer
      %s17 = sadd.s32 1, %s13
    $region7: #{tpu_custom_call.1} parent=1 // loop_footer_branch
      %12 = sbr.rel target = $region3
    $region8: #{tpu_custom_call.1} parent=1 // loop_exit
      _
    %315 = vsyncpa [#allocation3], 1
    %s316 = scalar_lea.sflag [#allocation3], 1
    %317 = vsyncpa %s316, 1
    %318 = vsyncpa [#allocation4], 1
    %s319 = scalar_lea.sflag [#allocation4], 1
    %320 = vsyncpa %s319, 1

</llo_original>
